<compile_context>
chip_gen: v5e
topology: v5e:2x2
jax: 0.10.0
libtpu: 0.0.40
codegen_flags: <defaults>
</compile_context>

<pallas_src>
import jax
import jax.numpy as jnp
from jax import lax
from jax.experimental import pallas as pl
from jax.experimental.pallas import tpu as pltpu

LANES = 128
SUBLANES = 8


def ccc_loss(prediction, ground_truth, *, max_block_rows=512):
    """Concordance Correlation Coefficient computed in a Pallas TPU kernel.

    prediction, ground_truth: 1-D arrays of identical length N (any float
    dtype; accumulation is in f32). Returns a float32 scalar.
    """
    assert prediction.shape == ground_truth.shape
    assert prediction.ndim == 1
    n = int(prediction.shape[0])
    assert n >= 2, "CCC needs n >= 2 (unbiased variance), matching torch.var"

    # Lane/sublane-dense layout: (rows, 128), rows rounded up to a multiple
    # of 8 so every tile is (8,128)-aligned.
    rows = pl.cdiv(n, LANES)
    rows = pl.cdiv(rows, SUBLANES) * SUBLANES
    padded = rows * LANES

    # Tile rows: multiple of 8, ~0.25 MiB f32 per input per buffer at 512.
    # (Sized for v7x's 64 MiB VMEM / v5e's 16 MiB default scoped limit.)
    block_rows = min(max_block_rows, rows)
    nsteps = pl.cdiv(rows, block_rows)  # last block may be partial -> masked

    def to_slab(x):
        if padded != n:
            x = jnp.pad(x, (0, padded - n))  # pad values are masked in-kernel
        return x.reshape(rows, LANES)        # keep native dtype through HBM

    p2d = to_slab(prediction)
    g2d = to_slab(ground_truth)
    # Common pivot makes the raw-moment accumulation shift-invariant (exact).
    pivot = ground_truth[:1].astype(jnp.float32)  # (1,) f32, lives in SMEM

    def kernel(pivot_ref, pred_ref, gt_ref, out_ref,
               sp_ref, sg_ref, spp_ref, sgg_ref, spg_ref):
        i = pl.program_id(0)

        @pl.when(i == 0)
        def _init():
            for r in (sp_ref, sg_ref, spp_ref, sgg_ref, spg_ref):
                r[...] = jnp.zeros_like(r)

        piv = pivot_ref[0]
        p = pred_ref[...].astype(jnp.float32)   # cast on the tile, not in HBM
        g = gt_ref[...].astype(jnp.float32)

        # Mask out explicit zero-pad and the (undefined) implicit padding of
        # a partial last block, via the global element index.
        row_ids = lax.broadcasted_iota(jnp.int32, p.shape, 0)
        col_ids = lax.broadcasted_iota(jnp.int32, p.shape, 1)
        idx = (i * block_rows + row_ids) * LANES + col_ids
        valid = idx < n

        pc = jnp.where(valid, p - piv, 0.0)
        gc = jnp.where(valid, g - piv, 0.0)

        # Collapse (block_rows,128) -> (8,128) with pure VPU vreg adds; no
        # cross-lane (XLU) reduction here.
        pc3 = pc.reshape(block_rows // SUBLANES, SUBLANES, LANES)
        gc3 = gc.reshape(block_rows // SUBLANES, SUBLANES, LANES)

        sp_ref[...] += jnp.sum(pc3, axis=0)
        sg_ref[...] += jnp.sum(gc3, axis=0)
        spp_ref[...] += jnp.sum(pc3 * pc3, axis=0)
        sgg_ref[...] += jnp.sum(gc3 * gc3, axis=0)
        spg_ref[...] += jnp.sum(pc3 * gc3, axis=0)

        @pl.when(i == nsteps - 1)
        def _finalize():
            nf = jnp.float32(n)
            s_p = jnp.sum(sp_ref[...])     # single XLU reduce per quantity
            s_g = jnp.sum(sg_ref[...])
            s_pp = jnp.sum(spp_ref[...])
            s_gg = jnp.sum(sgg_ref[...])
            s_pg = jnp.sum(spg_ref[...])

            mean_p = s_p / nf              # means of pivot-shifted data
            mean_g = s_g / nf
            ss_p = s_pp - nf * mean_p * mean_p   # Σ (p - mean_p)^2
            ss_g = s_gg - nf * mean_g * mean_g   # Σ (g - mean_g)^2
            cov = s_pg - nf * mean_p * mean_g    # Σ (p-mp)(g-mg)

            var_p = ss_p / (nf - 1.0)
            var_g = ss_g / (nf - 1.0)
            # 2*cor*sd_g*sd_p == 2*cov/(n-1) exactly (pivot cancels in the
            # mean difference since it is shared by both streams).
            numer = 2.0 * cov / (nf - 1.0)
            denom = var_g + var_p + (mean_g - mean_p) ** 2
            out_ref[0, 0] = numer / denom

    out = pl.pallas_call(
        kernel,
        out_shape=jax.ShapeDtypeStruct((1, 1), jnp.float32),
        grid_spec=pltpu.PrefetchScalarGridSpec(
            num_scalar_prefetch=0,
            grid=(nsteps,),
            in_specs=[
                pl.BlockSpec(memory_space=pltpu.MemorySpace.SMEM),  # pivot
                pl.BlockSpec((block_rows, LANES), lambda i: (i, 0)),
                pl.BlockSpec((block_rows, LANES), lambda i: (i, 0)),
            ],
            out_specs=pl.BlockSpec(memory_space=pltpu.MemorySpace.SMEM),
            scratch_shapes=[pltpu.VMEM((SUBLANES, LANES), jnp.float32)] * 5,
        ),
        compiler_params=pltpu.CompilerParams(
            # Reduction axis carries the accumulators -> must be "arbitrary".
            dimension_semantics=("arbitrary",),
        ),
    )(pivot, p2d, g2d)
    # TODO(synk): for very large N on v7x, add a leading "parallel" axis (or
    # core_map over the 2 TensorCores) and combine two partial-sum sets.
    return out.reshape(())


def _ccc_reference(prediction, ground_truth):
    # Pure-JAX reference mirroring the PyTorch forward exactly.
    prediction = prediction.astype(jnp.float32)
    ground_truth = ground_truth.astype(jnp.float32)
    mean_gt = jnp.mean(ground_truth, 0)
    mean_pred = jnp.mean(prediction, 0)
    var_gt = jnp.var(ground_truth, 0, ddof=1)
    var_pred = jnp.var(prediction, 0, ddof=1)
    v_pred = prediction - mean_pred
    v_gt = ground_truth - mean_gt
    cor = jnp.sum(v_pred * v_gt) / (
        jnp.sqrt(jnp.sum(v_pred ** 2)) * jnp.sqrt(jnp.sum(v_gt ** 2))
    )
    sd_gt = jnp.std(ground_truth, ddof=1)
    sd_pred = jnp.std(prediction, ddof=1)
    numerator = 2 * cor * sd_gt * sd_pred
    denominator = var_gt + var_pred + (mean_gt - mean_pred) ** 2
    return numerator / denominator


if __name__ == "__main__":
    key = jax.random.PRNGKey(0)

    # Two small cases: one single-tile with a ragged tail, one multi-step
    # grid with a partial last block (exercises the mask + accumulator path).
    for n in (1000, 70000):
        key, k1, k2 = jax.random.split(key, 3)
        prediction = jax.random.normal(k1, (n,), dtype=jnp.float32) + 0.3
        ground_truth = (0.8 * prediction
                        + 0.2 * jax.random.normal(k2, (n,), dtype=jnp.float32))

        ccc = ccc_loss(prediction, ground_truth)
        jax.block_until_ready(ccc)

        ref = _ccc_reference(prediction, ground_truth)
        assert jnp.allclose(ccc, ref, rtol=1e-4, atol=1e-4), (n, ccc, ref)

    print("KERNEL_OK")
</pallas_src>

<mosaic_0001>
module attributes {stable_mosaic.version = 11 : i64} {
  func.func @kernel(%arg0: i32, %arg1: memref<1xf32, #tpu.memory_space<smem>>, %arg2: memref<8x128xf32, #tpu.memory_space<vmem>>, %arg3: memref<8x128xf32, #tpu.memory_space<vmem>>, %arg4: memref<1x1xf32, #tpu.memory_space<smem>>, %arg5: memref<8x128xf32, #tpu.memory_space<vmem>>, %arg6: memref<8x128xf32, #tpu.memory_space<vmem>>, %arg7: memref<8x128xf32, #tpu.memory_space<vmem>>, %arg8: memref<8x128xf32, #tpu.memory_space<vmem>>, %arg9: memref<8x128xf32, #tpu.memory_space<vmem>>) attributes {dimension_semantics = [#tpu.dimension_semantics<arbitrary>], iteration_bounds = array<i64: 1>, scalar_prefetch = 0 : i64, scratch_operands = 5 : i64, tpu.core_type = #tpu.core_type<tc>, window_params = [{transform_indices = @transform_0, window_bounds = array<i64: 1>}, {transform_indices = @transform_1, window_bounds = array<i64: 8, 128>}, {transform_indices = @transform_2, window_bounds = array<i64: 8, 128>}, {transform_indices = @transform_3, window_bounds = array<i64: 1, 1>}]} {
    %c0_i32 = arith.constant 0 : i32
    %0 = arith.cmpi eq, %arg0, %c0_i32 : i32
    %1 = arith.extui %0 : i1 to i32
    %c0_i32_0 = arith.constant 0 : i32
    %2 = arith.cmpi ne, %1, %c0_i32_0 : i32
    scf.if %2 {
      %cst_33 = arith.constant 0.000000e+00 : f32
      %52 = vector.broadcast %cst_33 : f32 to vector<8x128xf32>
      %c0_34 = arith.constant 0 : index
      %c0_35 = arith.constant 0 : index
      %53 = vector.load %arg5[%c0_34, %c0_35] : memref<8x128xf32, #tpu.memory_space<vmem>>, vector<8x128xf32>
      tpu.vector_store %arg5[%c0_34, %c0_35], %52 {strides = array<i32>} : memref<8x128xf32, #tpu.memory_space<vmem>>, vector<8x128xf32>,
      %cst_36 = arith.constant 0.000000e+00 : f32
      %54 = vector.broadcast %cst_36 : f32 to vector<8x128xf32>
      %c0_37 = arith.constant 0 : index
      %c0_38 = arith.constant 0 : index
      %55 = vector.load %arg6[%c0_37, %c0_38] : memref<8x128xf32, #tpu.memory_space<vmem>>, vector<8x128xf32>
      tpu.vector_store %arg6[%c0_37, %c0_38], %54 {strides = array<i32>} : memref<8x128xf32, #tpu.memory_space<vmem>>, vector<8x128xf32>,
      %cst_39 = arith.constant 0.000000e+00 : f32
      %56 = vector.broadcast %cst_39 : f32 to vector<8x128xf32>
      %c0_40 = arith.constant 0 : index
      %c0_41 = arith.constant 0 : index
      %57 = vector.load %arg7[%c0_40, %c0_41] : memref<8x128xf32, #tpu.memory_space<vmem>>, vector<8x128xf32>
      tpu.vector_store %arg7[%c0_40, %c0_41], %56 {strides = array<i32>} : memref<8x128xf32, #tpu.memory_space<vmem>>, vector<8x128xf32>,
      %cst_42 = arith.constant 0.000000e+00 : f32
      %58 = vector.broadcast %cst_42 : f32 to vector<8x128xf32>
      %c0_43 = arith.constant 0 : index
      %c0_44 = arith.constant 0 : index
      %59 = vector.load %arg8[%c0_43, %c0_44] : memref<8x128xf32, #tpu.memory_space<vmem>>, vector<8x128xf32>
      tpu.vector_store %arg8[%c0_43, %c0_44], %58 {strides = array<i32>} : memref<8x128xf32, #tpu.memory_space<vmem>>, vector<8x128xf32>,
      %cst_45 = arith.constant 0.000000e+00 : f32
      %60 = vector.broadcast %cst_45 : f32 to vector<8x128xf32>
      %c0_46 = arith.constant 0 : index
      %c0_47 = arith.constant 0 : index
      %61 = vector.load %arg9[%c0_46, %c0_47] : memref<8x128xf32, #tpu.memory_space<vmem>>, vector<8x128xf32>
      tpu.vector_store %arg9[%c0_46, %c0_47], %60 {strides = array<i32>} : memref<8x128xf32, #tpu.memory_space<vmem>>, vector<8x128xf32>,
    } else {
    }
    %c0 = arith.constant 0 : index
    %3 = memref.load %arg1[%c0] : memref<1xf32, #tpu.memory_space<smem>>
    %c0_1 = arith.constant 0 : index
    %c0_2 = arith.constant 0 : index
    %4 = vector.load %arg2[%c0_1, %c0_2] : memref<8x128xf32, #tpu.memory_space<vmem>>, vector<8x128xf32>
    %c0_3 = arith.constant 0 : index
    %c0_4 = arith.constant 0 : index
    %5 = vector.load %arg3[%c0_3, %c0_4] : memref<8x128xf32, #tpu.memory_space<vmem>>, vector<8x128xf32>
    %6 = tpu.iota {dimensions = array<i32: 0>} : vector<8x128xi32>
    %7 = tpu.iota {dimensions = array<i32: 1>} : vector<8x128xi32>
    %c8_i32 = arith.constant 8 : i32
    %8 = arith.muli %arg0, %c8_i32 : i32
    %9 = vector.broadcast %8 : i32 to vector<8x128xi32>
    %10 = arith.addi %9, %6 : vector<8x128xi32>
    %c128_i32 = arith.constant 128 : i32
    %11 = vector.broadcast %c128_i32 : i32 to vector<8x128xi32>
    %12 = arith.muli %10, %11 : vector<8x128xi32>
    %13 = arith.addi %12, %7 : vector<8x128xi32>
    %c1000_i32 = arith.constant 1000 : i32
    %14 = vector.broadcast %c1000_i32 : i32 to vector<8x128xi32>
    %15 = arith.cmpi slt, %13, %14 : vector<8x128xi32>
    %16 = vector.broadcast %3 : f32 to vector<8x128xf32>
    %17 = arith.subf %4, %16 : vector<8x128xf32>
    %cst = arith.constant 0.000000e+00 : f32
    %18 = vector.broadcast %cst : f32 to vector<8x128xf32>
    %19 = arith.select %15, %17, %18 : vector<8x128xi1>, vector<8x128xf32>
    %20 = vector.broadcast %3 : f32 to vector<8x128xf32>
    %21 = arith.subf %5, %20 : vector<8x128xf32>
    %cst_5 = arith.constant 0.000000e+00 : f32
    %22 = vector.broadcast %cst_5 : f32 to vector<8x128xf32>
    %23 = arith.select %15, %21, %22 : vector<8x128xi1>, vector<8x128xf32>
    %24 = vector.shape_cast %19 : vector<8x128xf32> to vector<1x8x128xf32>
    %25 = vector.shape_cast %23 : vector<8x128xf32> to vector<1x8x128xf32>
    %c0_6 = arith.constant 0 : index
    %c0_7 = arith.constant 0 : index
    %26 = vector.load %arg5[%c0_6, %c0_7] : memref<8x128xf32, #tpu.memory_space<vmem>>, vector<8x128xf32>
    %cst_8 = arith.constant dense<0.000000e+00> : vector<8x128xf32>
    %27 = vector.multi_reduction <add>, %24, %cst_8 [0] : vector<1x8x128xf32> to vector<8x128xf32>
    %28 = arith.addf %26, %27 : vector<8x128xf32>
    %c0_9 = arith.constant 0 : index
    %c0_10 = arith.constant 0 : index
    %29 = vector.load %arg5[%c0_9, %c0_10] : memref<8x128xf32, #tpu.memory_space<vmem>>, vector<8x128xf32>
    tpu.vector_store %arg5[%c0_9, %c0_10], %28 {strides = array<i32>} : memref<8x128xf32, #tpu.memory_space<vmem>>, vector<8x128xf32>,
    %c0_11 = arith.constant 0 : index
    %c0_12 = arith.constant 0 : index
    %30 = vector.load %arg6[%c0_11, %c0_12] : memref<8x128xf32, #tpu.memory_space<vmem>>, vector<8x128xf32>
    %cst_13 = arith.constant dense<0.000000e+00> : vector<8x128xf32>
    %31 = vector.multi_reduction <add>, %25, %cst_13 [0] : vector<1x8x128xf32> to vector<8x128xf32>
    %32 = arith.addf %30, %31 : vector<8x128xf32>
    %c0_14 = arith.constant 0 : index
    %c0_15 = arith.constant 0 : index
    %33 = vector.load %arg6[%c0_14, %c0_15] : memref<8x128xf32, #tpu.memory_space<vmem>>, vector<8x128xf32>
    tpu.vector_store %arg6[%c0_14, %c0_15], %32 {strides = array<i32>} : memref<8x128xf32, #tpu.memory_space<vmem>>, vector<8x128xf32>,
    %c0_16 = arith.constant 0 : index
    %c0_17 = arith.constant 0 : index
    %34 = vector.load %arg7[%c0_16, %c0_17] : memref<8x128xf32, #tpu.memory_space<vmem>>, vector<8x128xf32>
    %35 = arith.mulf %24, %24 : vector<1x8x128xf32>
    %cst_18 = arith.constant dense<0.000000e+00> : vector<8x128xf32>
    %36 = vector.multi_reduction <add>, %35, %cst_18 [0] : vector<1x8x128xf32> to vector<8x128xf32>
    %37 = arith.addf %34, %36 : vector<8x128xf32>
    %c0_19 = arith.constant 0 : index
    %c0_20 = arith.constant 0 : index
    %38 = vector.load %arg7[%c0_19, %c0_20] : memref<8x128xf32, #tpu.memory_space<vmem>>, vector<8x128xf32>
    tpu.vector_store %arg7[%c0_19, %c0_20], %37 {strides = array<i32>} : memref<8x128xf32, #tpu.memory_space<vmem>>, vector<8x128xf32>,
    %c0_21 = arith.constant 0 : index
    %c0_22 = arith.constant 0 : index
    %39 = vector.load %arg8[%c0_21, %c0_22] : memref<8x128xf32, #tpu.memory_space<vmem>>, vector<8x128xf32>
    %40 = arith.mulf %25, %25 : vector<1x8x128xf32>
    %cst_23 = arith.constant dense<0.000000e+00> : vector<8x128xf32>
    %41 = vector.multi_reduction <add>, %40, %cst_23 [0] : vector<1x8x128xf32> to vector<8x128xf32>
    %42 = arith.addf %39, %41 : vector<8x128xf32>
    %c0_24 = arith.constant 0 : index
    %c0_25 = arith.constant 0 : index
    %43 = vector.load %arg8[%c0_24, %c0_25] : memref<8x128xf32, #tpu.memory_space<vmem>>, vector<8x128xf32>
    tpu.vector_store %arg8[%c0_24, %c0_25], %42 {strides = array<i32>} : memref<8x128xf32, #tpu.memory_space<vmem>>, vector<8x128xf32>,
    %c0_26 = arith.constant 0 : index
    %c0_27 = arith.constant 0 : index
    %44 = vector.load %arg9[%c0_26, %c0_27] : memref<8x128xf32, #tpu.memory_space<vmem>>, vector<8x128xf32>
    %45 = arith.mulf %24, %25 : vector<1x8x128xf32>
    %cst_28 = arith.constant dense<0.000000e+00> : vector<8x128xf32>
    %46 = vector.multi_reduction <add>, %45, %cst_28 [0] : vector<1x8x128xf32> to vector<8x128xf32>
    %47 = arith.addf %44, %46 : vector<8x128xf32>
    %c0_29 = arith.constant 0 : index
    %c0_30 = arith.constant 0 : index
    %48 = vector.load %arg9[%c0_29, %c0_30] : memref<8x128xf32, #tpu.memory_space<vmem>>, vector<8x128xf32>
    tpu.vector_store %arg9[%c0_29, %c0_30], %47 {strides = array<i32>} : memref<8x128xf32, #tpu.memory_space<vmem>>, vector<8x128xf32>,
    %c0_i32_31 = arith.constant 0 : i32
    %49 = arith.cmpi eq, %arg0, %c0_i32_31 : i32
    %50 = arith.extui %49 : i1 to i32
    %c0_i32_32 = arith.constant 0 : i32
    %51 = arith.cmpi ne, %50, %c0_i32_32 : i32
    scf.if %51 {
      %c0_33 = arith.constant 0 : index
      %c0_34 = arith.constant 0 : index
      %52 = vector.load %arg5[%c0_33, %c0_34] : memref<8x128xf32, #tpu.memory_space<vmem>>, vector<8x128xf32>
      %53 = vector.shape_cast %52 : vector<8x128xf32> to vector<1x8x128xf32>
      %cst_35 = arith.constant dense<0.000000e+00> : vector<1xf32>
      %54 = vector.multi_reduction <add>, %53, %cst_35 [1, 2] : vector<1x8x128xf32> to vector<1xf32>
      %55 = vector.shape_cast %54 : vector<1xf32> to vector<1x1x1xf32>
      %56 = vector.extract %55[0, 0, 0] : f32 from vector<1x1x1xf32>
      %c0_36 = arith.constant 0 : index
      %c0_37 = arith.constant 0 : index
      %57 = vector.load %arg6[%c0_36, %c0_37] : memref<8x128xf32, #tpu.memory_space<vmem>>, vector<8x128xf32>
      %58 = vector.shape_cast %57 : vector<8x128xf32> to vector<1x8x128xf32>
      %cst_38 = arith.constant dense<0.000000e+00> : vector<1xf32>
      %59 = vector.multi_reduction <add>, %58, %cst_38 [1, 2] : vector<1x8x128xf32> to vector<1xf32>
      %60 = vector.shape_cast %59 : vector<1xf32> to vector<1x1x1xf32>
      %61 = vector.extract %60[0, 0, 0] : f32 from vector<1x1x1xf32>
      %c0_39 = arith.constant 0 : index
      %c0_40 = arith.constant 0 : index
      %62 = vector.load %arg7[%c0_39, %c0_40] : memref<8x128xf32, #tpu.memory_space<vmem>>, vector<8x128xf32>
      %63 = vector.shape_cast %62 : vector<8x128xf32> to vector<1x8x128xf32>
      %cst_41 = arith.constant dense<0.000000e+00> : vector<1xf32>
      %64 = vector.multi_reduction <add>, %63, %cst_41 [1, 2] : vector<1x8x128xf32> to vector<1xf32>
      %65 = vector.shape_cast %64 : vector<1xf32> to vector<1x1x1xf32>
      %66 = vector.extract %65[0, 0, 0] : f32 from vector<1x1x1xf32>
      %c0_42 = arith.constant 0 : index
      %c0_43 = arith.constant 0 : index
      %67 = vector.load %arg8[%c0_42, %c0_43] : memref<8x128xf32, #tpu.memory_space<vmem>>, vector<8x128xf32>
      %68 = vector.shape_cast %67 : vector<8x128xf32> to vector<1x8x128xf32>
      %cst_44 = arith.constant dense<0.000000e+00> : vector<1xf32>
      %69 = vector.multi_reduction <add>, %68, %cst_44 [1, 2] : vector<1x8x128xf32> to vector<1xf32>
      %70 = vector.shape_cast %69 : vector<1xf32> to vector<1x1x1xf32>
      %71 = vector.extract %70[0, 0, 0] : f32 from vector<1x1x1xf32>
      %c0_45 = arith.constant 0 : index
      %c0_46 = arith.constant 0 : index
      %72 = vector.load %arg9[%c0_45, %c0_46] : memref<8x128xf32, #tpu.memory_space<vmem>>, vector<8x128xf32>
      %73 = vector.shape_cast %72 : vector<8x128xf32> to vector<1x8x128xf32>
      %cst_47 = arith.constant dense<0.000000e+00> : vector<1xf32>
      %74 = vector.multi_reduction <add>, %73, %cst_47 [1, 2] : vector<1x8x128xf32> to vector<1xf32>
      %75 = vector.shape_cast %74 : vector<1xf32> to vector<1x1x1xf32>
      %76 = vector.extract %75[0, 0, 0] : f32 from vector<1x1x1xf32>
      %cst_48 = arith.constant 1.000000e+03 : f32
      %77 = arith.divf %56, %cst_48 : f32
      %cst_49 = arith.constant 1.000000e+03 : f32
      %78 = arith.divf %61, %cst_49 : f32
      %cst_50 = arith.constant 1.000000e+03 : f32
      %79 = arith.mulf %cst_50, %77 : f32
      %80 = arith.mulf %79, %77 : f32
      %81 = arith.subf %66, %80 : f32
      %cst_51 = arith.constant 1.000000e+03 : f32
      %82 = arith.mulf %cst_51, %78 : f32
      %83 = arith.mulf %82, %78 : f32
      %84 = arith.subf %71, %83 : f32
      %cst_52 = arith.constant 1.000000e+03 : f32
      %85 = arith.mulf %cst_52, %77 : f32
      %86 = arith.mulf %85, %78 : f32
      %87 = arith.subf %76, %86 : f32
      %cst_53 = arith.constant 1.000000e+03 : f32
      %cst_54 = arith.constant 1.000000e+00 : f32
      %88 = arith.subf %cst_53, %cst_54 : f32
      %89 = arith.divf %81, %88 : f32
      %cst_55 = arith.constant 1.000000e+03 : f32
      %cst_56 = arith.constant 1.000000e+00 : f32
      %90 = arith.subf %cst_55, %cst_56 : f32
      %91 = arith.divf %84, %90 : f32
      %cst_57 = arith.constant 2.000000e+00 : f32
      %92 = arith.mulf %cst_57, %87 : f32
      %cst_58 = arith.constant 1.000000e+03 : f32
      %cst_59 = arith.constant 1.000000e+00 : f32
      %93 = arith.subf %cst_58, %cst_59 : f32
      %94 = arith.divf %92, %93 : f32
      %95 = arith.addf %91, %89 : f32
      %96 = arith.subf %78, %77 : f32
      %97 = arith.mulf %96, %96 : f32
      %98 = arith.addf %95, %97 : f32
      %99 = arith.divf %94, %98 : f32
      %c0_60 = arith.constant 0 : index
      %c0_61 = arith.constant 0 : index
      %100 = memref.load %arg4[%c0_60, %c0_61] : memref<1x1xf32, #tpu.memory_space<smem>>
      memref.store %99, %arg4[%c0_60, %c0_61] : memref<1x1xf32, #tpu.memory_space<smem>>
    } else {
    }
    return
  }
  func.func @transform_0(%arg0: i32) -> i32 {
    %c0_i32 = arith.constant 0 : i32
    %c0_i32_0 = arith.constant 0 : i32
    return %c0_i32 : i32
  }
  func.func @transform_1(%arg0: i32) -> (i32, i32) {
    %c0_i32 = arith.constant 0 : i32
    %c0_i32_0 = arith.constant 0 : i32
    return %arg0, %c0_i32 : i32, i32
  }
  func.func @transform_2(%arg0: i32) -> (i32, i32) {
    %c0_i32 = arith.constant 0 : i32
    %c0_i32_0 = arith.constant 0 : i32
    return %arg0, %c0_i32 : i32, i32
  }
  func.func @transform_3(%arg0: i32) -> (i32, i32) {
    %c0_i32 = arith.constant 0 : i32
    %c0_i32_0 = arith.constant 0 : i32
    %c0_i32_1 = arith.constant 0 : i32
    return %c0_i32, %c0_i32_0 : i32, i32
  }
}

</mosaic_0001>

<llo_original>
// kernel: tpu_custom_call.1
$region0: #{tpu_custom_call.1}
  #allocation0 [shape = 'u32[]', space=smem, size = 0x4, offset = 0x4, fixed_abs, tag = 'smem constant byte address 0x4 - core index']
  #allocation1 [shape = 'u32[72,128]{1,0:T(1,128)}', space=vmem, size = 0x9000, scoped, tag = 'internal scratch']
  #allocation2 [shape = 'f32[8,128]{1,0:T(8,128)}', space=vmem, size = 0x1000, scoped, tag = 'scratch operand']
  #allocation3 [shape = 'f32[8,128]{1,0:T(8,128)}', space=vmem, size = 0x1000, scoped, tag = 'scratch operand']
  #allocation4 [shape = 'f32[8,128]{1,0:T(8,128)}', space=vmem, size = 0x1000, scoped, tag = 'scratch operand']
  #allocation5 [shape = 'f32[8,128]{1,0:T(8,128)}', space=vmem, size = 0x1000, scoped, tag = 'scratch operand']
  #allocation6 [shape = 'f32[8,128]{1,0:T(8,128)}', space=vmem, size = 0x1000, scoped, tag = 'scratch operand']
  #allocation7 [shape = 'f32[1]{0:T(128)S(6)}', space=smem, size = 0x200, scoped, tag = 'scoped memory for tpu_custom_call.1']
  %s0 = inlined_call_operand.<no memory space> [shape: f32[1], index: 0, kind: input, shape index: {}]
  %s1 = inlined_call_operand.hbm [shape: f32[8,128], index: 1, kind: input, shape index: {}]
  %s2 = inlined_call_operand.hbm [shape: f32[8,128], index: 2, kind: input, shape index: {}]
  %s3 = inlined_call_operand.hbm [shape: f32[1,1], index: 3, kind: output, shape index: {}]
  %s4 = sld [smem:[#allocation0]]
  $region38: #{tpu_custom_call.1} parent=0
    _
  %s6 = ssub.s32 1, %s4
  %s7 = scalar_select 0, %s6, %s4
  %8 = sst [smem:[#allocation7]] %s0
  $region1: #{tpu_custom_call.1} parent=0
    #allocation8 [shape = 'u8[4096]{0}', space=vmem, size = 0x1000, scoped, tag = 'input window, operand 1, single buffered']
    #allocation9 [shape = 's32[1]{0}', space=sflag, size = 0x4, scoped, tag = 'scoped memory for tpu_custom_call.1']
    #allocation10 [shape = 's32[1]{0}', space=sflag, size = 0x4, scoped, tag = 'scoped memory for tpu_custom_call.1']
    #allocation11 [shape = 'u8[4096]{0}', space=vmem, size = 0x1000, scoped, tag = 'input window, operand 2, single buffered']
    #allocation12 [shape = 's32[1]{0}', space=sflag, size = 0x4, scoped, tag = 'scoped memory for tpu_custom_call.1']
    #allocation13 [shape = 'u8[512]{0}', space=smem, size = 0x200, scoped, tag = 'output window, operand 0, single buffered']
    %9 = vsyncpa [#allocation9], 0
    %10 = vsyncpa [#allocation12], 0
    %11 = vsyncpa [#allocation10], 0
    // Predicated region
    $region2: #{tpu_custom_call.1} parent=1 // pred_check
      _
    $region3: #{tpu_custom_call.1} parent=1 // pred_check_branch
      %13 = sbr.rel (0) target = $region5
    $region4: #{tpu_custom_call.1} parent=1 // pred_region
      _
    $region5: #{tpu_custom_call.1} parent=1 // pred_fallthru
      _
    // Predicated region
    $region6: #{tpu_custom_call.1} parent=1 // pred_check
      _
    $region7: #{tpu_custom_call.1} parent=1 // pred_check_branch
      %15 = sbr.rel (0) target = $region9
    $region8: #{tpu_custom_call.1} parent=1 // pred_region
      %17 = vsyncadd [#allocation9], 0
      %s19 = sshll.u32 %s1, 4
      %s20 = int_to_ptr.hbm [resolvable:$true] %s19
      %s21 = sshll.u32 [#allocation8], 4
      %s22 = int_to_ptr.vmem [resolvable:$true] %s21
      %24 = dma.hbm_to_vmem [thread:$0]  %s20, 128, %s22, [#allocation9]
    $region9: #{tpu_custom_call.1} parent=1 // pred_fallthru
      _
    // Predicated region
    $region10: #{tpu_custom_call.1} parent=1 // pred_check
      _
    $region11: #{tpu_custom_call.1} parent=1 // pred_check_branch
      %26 = sbr.rel (0) target = $region13
    $region12: #{tpu_custom_call.1} parent=1 // pred_region
      %28 = vsyncadd [#allocation12], 0
      %s30 = sshll.u32 %s2, 4
      %s31 = int_to_ptr.hbm [resolvable:$true] %s30
      %s32 = sshll.u32 [#allocation11], 4
      %s33 = int_to_ptr.vmem [resolvable:$true] %s32
      %35 = dma.hbm_to_vmem [thread:$0]  %s31, 128, %s33, [#allocation12]
    $region13: #{tpu_custom_call.1} parent=1 // pred_fallthru
      _
    // Predicated region
    $region14: #{tpu_custom_call.1} parent=1 // pred_check
      _
    $region15: #{tpu_custom_call.1} parent=1 // pred_check_branch
      %37 = sbr.rel (0) target = $region17
    $region16: #{tpu_custom_call.1} parent=1 // pred_region
      %39 = dma.done [#allocation9], 128
    $region17: #{tpu_custom_call.1} parent=1 // pred_fallthru
      _
    // Predicated region
    $region18: #{tpu_custom_call.1} parent=1 // pred_check
      _
    $region19: #{tpu_custom_call.1} parent=1 // pred_check_branch
      %41 = sbr.rel (0) target = $region21
    $region20: #{tpu_custom_call.1} parent=1 // pred_region
      %43 = dma.done [#allocation12], 128
    $region21: #{tpu_custom_call.1} parent=1 // pred_fallthru
      _
    %p44 = scmp.eq.s32.totalorder 0, 0
    // Predicated region
    $region22: #{tpu_custom_call.1} parent=1 // pred_check
      %p45 = pneg %p44
    $region23: #{tpu_custom_call.1} parent=1 // pred_check_branch
      %47 = sbr.rel (%p45) target = $region25
    $region24: #{tpu_custom_call.1} parent=1 // pred_region
      %48 = vst [vmem:[#allocation2] sm:$0xff] 0.0
      %49 = vst [vmem:[#allocation3] sm:$0xff] 0.0
      %50 = vst [vmem:[#allocation4] sm:$0xff] 0.0
      %51 = vst [vmem:[#allocation5] sm:$0xff] 0.0
      %52 = vst [vmem:[#allocation6] sm:$0xff] 0.0
    $region25: #{tpu_custom_call.1} parent=1 // pred_fallthru
      _
    %s53 = sld [smem:[#allocation7]]
    %v54 = vld [vmem:[#allocation8] sm:$0xff]
    %v55 = vld [vmem:[#allocation11] sm:$0xff]
    %v56 = vlaneseq
    %v57 = vshrl.u32 %v56, 7
    %v58 = vlaneseq
    %v59 = vand.u32 %v58, 127
    %s60 = smul.u32 0, 8
    %v61 = vstv %s60
    %v62 = vadd.s32 %v61, %v57
    %v63 = vmul.u32 %v62, 128
    %v64 = vadd.s32 %v63, %v59
    %vm65 = vcmp.lt.s32.totalorder %v64, 1000
    %v66 = vstv %s53
    %v67 = vsub.f32 %v54, %v66
    %v68 = vsel %vm65, %v67, 0.0
    %v69 = vsub.f32 %v55, %v66
    %v70 = vsel %vm65, %v69, 0.0
    %v71 = vld [vmem:[#allocation2] sm:$0xff]
    %v72 = vadd.f32 %v68, 0.0
    %v73 = vadd.f32 %v71, %v72
    %74 = vst [vmem:[#allocation2] sm:$0xff] %v73
    %v75 = vld [vmem:[#allocation3] sm:$0xff]
    %v76 = vadd.f32 %v70, 0.0
    %v77 = vadd.f32 %v75, %v76
    %78 = vst [vmem:[#allocation3] sm:$0xff] %v77
    %v79 = vld [vmem:[#allocation4] sm:$0xff]
    %v80 = vmul.f32 %v68, %v68
    %v81 = vadd.f32 %v80, 0.0
    %v82 = vadd.f32 %v79, %v81
    %83 = vst [vmem:[#allocation4] sm:$0xff] %v82
    %v84 = vld [vmem:[#allocation5] sm:$0xff]
    %v85 = vmul.f32 %v70, %v70
    %v86 = vadd.f32 %v85, 0.0
    %v87 = vadd.f32 %v84, %v86
    %88 = vst [vmem:[#allocation5] sm:$0xff] %v87
    %v89 = vld [vmem:[#allocation6] sm:$0xff]
    %v90 = vmul.f32 %v68, %v70
    %v91 = vadd.f32 %v90, 0.0
    %v92 = vadd.f32 %v89, %v91
    %93 = vst [vmem:[#allocation6] sm:$0xff] %v92
    // Predicated region
    $region26: #{tpu_custom_call.1} parent=1 // pred_check
      %p94 = pneg %p44
    $region27: #{tpu_custom_call.1} parent=1 // pred_check_branch
      %96 = sbr.rel (%p94) target = $region29
    $region28: #{tpu_custom_call.1} parent=1 // pred_region
      %v97 = vld [vmem:[#allocation2] sm:$0xff]
      %98 = vadd.xlane.f32.xlu0 %v97
      %v99 = vpop.xlane.xlu0 %98
      %v100 = vrot.slane %v99, 4
      %v101 = vadd.f32 %v99, %v100
      %v102 = vrot.slane %v101, 2
      %v103 = vadd.f32 %v101, %v102
      %v104 = vrot.slane %v103, 1
      %v105 = vadd.f32 %v103, %v104
      %s106 = vtos %v105
      %v107 = vld [vmem:[#allocation3] sm:$0xff]
      %108 = vadd.xlane.f32.xlu0 %v107
      %v109 = vpop.xlane.xlu0 %108
      %v110 = vrot.slane %v109, 4
      %v111 = vadd.f32 %v109, %v110
      %v112 = vrot.slane %v111, 2
      %v113 = vadd.f32 %v111, %v112
      %v114 = vrot.slane %v113, 1
      %v115 = vadd.f32 %v113, %v114
      %s116 = vtos %v115
      %v117 = vld [vmem:[#allocation4] sm:$0xff]
      %118 = vadd.xlane.f32.xlu0 %v117
      %v119 = vpop.xlane.xlu0 %118
      %v120 = vrot.slane %v119, 4
      %v121 = vadd.f32 %v119, %v120
      %v122 = vrot.slane %v121, 2
      %v123 = vadd.f32 %v121, %v122
      %v124 = vrot.slane %v123, 1
      %v125 = vadd.f32 %v123, %v124
      %s126 = vtos %v125
      %v127 = vld [vmem:[#allocation5] sm:$0xff]
      %128 = vadd.xlane.f32.xlu0 %v127
      %v129 = vpop.xlane.xlu0 %128
      %v130 = vrot.slane %v129, 4
      %v131 = vadd.f32 %v129, %v130
      %v132 = vrot.slane %v131, 2
      %v133 = vadd.f32 %v131, %v132
      %v134 = vrot.slane %v133, 1
      %v135 = vadd.f32 %v133, %v134
      %s136 = vtos %v135
      %v137 = vld [vmem:[#allocation6] sm:$0xff]
      %138 = vadd.xlane.f32.xlu0 %v137
      %v139 = vpop.xlane.xlu0 %138
      %v140 = vrot.slane %v139, 4
      %v141 = vadd.f32 %v139, %v140
      %v142 = vrot.slane %v141, 2
      %v143 = vadd.f32 %v141, %v142
      %v144 = vrot.slane %v143, 1
      %v145 = vadd.f32 %v143, %v144
      %s146 = vtos %v145
      %v147 = vrcp.pop 1000.0
      %v148 = vmul.f32 1000.0, %v147
      %v149 = vsub.f32 1.0, %v148
      %v150 = vmul.f32 %v147, %v149
      %v151 = vadd.f32 %v147, %v150
      %vm152 = vweird.f32 %v147
      %v153 = vsel %vm152, %v147, %v151
      %s154 = vtos %v153
      %s155 = smul.f32 %s106, %s154
      %v156 = vrcp.pop 1000.0
      %v157 = vmul.f32 1000.0, %v156
      %v158 = vsub.f32 1.0, %v157
      %v159 = vmul.f32 %v156, %v158
      %v160 = vadd.f32 %v156, %v159
      %vm161 = vweird.f32 %v156
      %v162 = vsel %vm161, %v156, %v160
      %s163 = vtos %v162
      %s164 = smul.f32 %s116, %s163
      %s165 = smul.f32 %s155, 1000.0
      %s166 = smul.f32 %s165, %s155
      %s167 = ssub.f32 %s126, %s166
      %s168 = smul.f32 %s164, 1000.0
      %s169 = smul.f32 %s168, %s164
      %s170 = ssub.f32 %s136, %s169
      %s171 = smul.f32 %s165, %s164
      %s172 = ssub.f32 %s146, %s171
      %v173 = vrcp.pop 999.0
      %v174 = vmul.f32 999.0, %v173
      %v175 = vsub.f32 1.0, %v174
      %v176 = vmul.f32 %v173, %v175
      %v177 = vadd.f32 %v173, %v176
      %vm178 = vweird.f32 %v173
      %v179 = vsel %vm178, %v173, %v177
      %s180 = vtos %v179
      %s181 = smul.f32 %s167, %s180
      %v182 = vrcp.pop 999.0
      %v183 = vmul.f32 999.0, %v182
      %v184 = vsub.f32 1.0, %v183
      %v185 = vmul.f32 %v182, %v184
      %v186 = vadd.f32 %v182, %v185
      %vm187 = vweird.f32 %v182
      %v188 = vsel %vm187, %v182, %v186
      %s189 = vtos %v188
      %s190 = smul.f32 %s170, %s189
      %s191 = smul.f32 %s172, 2.0
      %v192 = vrcp.pop 999.0
      %v193 = vmul.f32 999.0, %v192
      %v194 = vsub.f32 1.0, %v193
      %v195 = vmul.f32 %v192, %v194
      %v196 = vadd.f32 %v192, %v195
      %vm197 = vweird.f32 %v192
      %v198 = vsel %vm197, %v192, %v196
      %s199 = vtos %v198
      %s200 = smul.f32 %s191, %s199
      %s201 = sadd.f32 %s190, %s181
      %s202 = ssub.f32 %s164, %s155
      %s203 = smul.f32 %s202, %s202
      %s204 = sadd.f32 %s201, %s203
      %v205 = vstv %s204
      %v206 = vrcp.pop %v205
      %v207 = vmul.f32 %v205, %v206
      %v208 = vsub.f32 1.0, %v207
      %v209 = vmul.f32 %v206, %v208
      %v210 = vadd.f32 %v206, %v209
      %vm211 = vweird.f32 %v205
      %vm212 = vweird.f32 %v206
      %vm213 = vmor %vm211, %vm212
      %v214 = vsel %vm213, %v206, %v210
      %v215 = vand.u32 2147483647, %v205
      %vm216 = vcmp.eq.f32.partialorder %v215, 8.507059e+37
      %v217 = vand.u32 %v205, 2147483648
      %v218 = vor.u32 1.1754944e-38, %v217
      %v219 = vsel %vm216, %v218, %v214
      %s220 = vtos %v219
      %s221 = smul.f32 %s200, %s220
      %s222 = scalar_lea.smem [#allocation13], 0
      %223 = sst [smem:[%s222]] %s221
    $region29: #{tpu_custom_call.1} parent=1 // pred_fallthru
      _
    // Predicated region
    $region30: #{tpu_custom_call.1} parent=1 // pred_check
      _
    $region31: #{tpu_custom_call.1} parent=1 // pred_check_branch
      %225 = sbr.rel (0) target = $region33
    $region32: #{tpu_custom_call.1} parent=1 // pred_region
      %227 = vsyncadd [#allocation10], 0
      %s229 = sshll.u32 %s3, 4
      %s230 = int_to_ptr.hbm [resolvable:$true] %s229
      %232 = dma.smem_to_hbm [#allocation13], 16, %s230, [#allocation10]
    $region33: #{tpu_custom_call.1} parent=1 // pred_fallthru
      _
    // Predicated region
    $region34: #{tpu_custom_call.1} parent=1 // pred_check
      _
    $region35: #{tpu_custom_call.1} parent=1 // pred_check_branch
      %234 = sbr.rel (0) target = $region37
    $region36: #{tpu_custom_call.1} parent=1 // pred_region
      %236 = dma.done [#allocation10], 16
    $region37: #{tpu_custom_call.1} parent=1 // pred_fallthru
      _
    %237 = sfence
    %238 = vsyncpa [#allocation9], 1
    %239 = vsyncpa [#allocation12], 1
    %240 = vsyncpa [#allocation10], 1

</llo_original>
